<compile_context>
chip_gen: v7x
topology: tpu7x:2x2x1
jax: 0.10.0
libtpu: 0.0.40
codegen_flags: <defaults>
</compile_context>

<pallas_src>
import functools

import jax
import jax.numpy as jnp
from jax import lax
from jax.experimental import pallas as pl
from jax.experimental.pallas import tpu as pltpu


def _round_up(x: int, m: int) -> int:
    return (x + m - 1) // m * m


# ----------------------------------------------------------------------------
# Kernels
# ----------------------------------------------------------------------------
def _mask_label_add_kernel(y_ref, x_ref, w_ref, out_ref, *, num_classes: int):
    """out = x + emb_weight[y]   with y == -1 for masked-out rows."""
    tn = x_ref.shape[0]
    y = y_ref[...]                                            # (tn, 1) int32
    cls = lax.broadcasted_iota(jnp.int32, (tn, num_classes), 1)
    one_hot = (cls == y).astype(jnp.float32)                  # all-zero row if y == -1
    emb = jnp.dot(one_hot, w_ref[...].astype(jnp.float32),
                  preferred_element_type=jnp.float32)         # (tn, C) via MXU
    out_ref[...] = (x_ref[...].astype(jnp.float32) + emb).astype(out_ref.dtype)


def _mask_label_concat_kernel(y_ref, x_ref, w_ref, out_ref, *, num_classes: int):
    """out = [x | emb_weight[y]]  (masked rows -> zero embedding), fused concat."""
    tn = x_ref.shape[0]
    y = y_ref[...]
    cls = lax.broadcasted_iota(jnp.int32, (tn, num_classes), 1)
    one_hot = (cls == y).astype(jnp.float32)
    emb = jnp.dot(one_hot, w_ref[...].astype(jnp.float32),
                  preferred_element_type=jnp.float32)
    out_ref[...] = jnp.concatenate(
        [x_ref[...].astype(out_ref.dtype), emb.astype(out_ref.dtype)], axis=-1)


# ----------------------------------------------------------------------------
# Wrapper
# ----------------------------------------------------------------------------
def mask_label(x, y, mask, emb_weight, method: str = "add", *, tile_n: int | None = None):
    """Pallas implementation of MaskLabel.forward.

    x:          [N, C_in]  float
    y:          [N]        integer class labels
    mask:       [N]        bool
    emb_weight: [num_classes, out_channels]
    """
    if method not in ("add", "concat"):
        raise ValueError(f"'method' must be either 'add' or 'concat' (got '{method}')")

    n, c_in = x.shape
    num_classes, out_channels = emb_weight.shape
    if method == "add" and out_channels != c_in:
        raise ValueError("method='add' requires out_channels == in_channels")

    out_cols = c_in if method == "add" else c_in + out_channels
    itemsize = jnp.dtype(x.dtype).itemsize

    # Fold the mask into the labels: masked-out rows -> label -1 -> zero one-hot.
    y_eff = jnp.where(mask, y.astype(jnp.int32), jnp.int32(-1)).reshape(n, 1)

    # Embedding table: single-buffer if large (it is grid-invariant).
    w_bytes = num_classes * out_channels * jnp.dtype(emb_weight.dtype).itemsize
    w_buf = 1 if w_bytes > (4 << 20) else 2

    # Pick the biggest node tile that fits a conservative VMEM budget
    # (double-buffered x/out/y + W + f32 one_hot/emb working set), capped at 1024.
    if tile_n is None:
        budget = max((16 << 20) - w_buf * w_bytes, 1 << 20)
        per_row = (2 * (c_in * itemsize + out_cols * itemsize + 4)      # x, out, y (x2 buf)
                   + (num_classes + out_channels) * 4)                  # one_hot + emb (f32)
        tile_n = max(8, min(1024, (budget // max(per_row, 1)) // 8 * 8))
    tile_n = max(8, _round_up(min(tile_n, max(n, 8)), 8))

    # Pad N to the tile instead of forcing tiny tiles for awkward node counts.
    n_pad = _round_up(n, tile_n)
    if n_pad != n:
        x_p = jnp.pad(x, ((0, n_pad - n), (0, 0)))
        y_p = jnp.pad(y_eff, ((0, n_pad - n), (0, 0)), constant_values=-1)
    else:
        x_p, y_p = x, y_eff

    # VMEM estimate -> compiler limit (keeps headroom, stays under v7x physical).
    vmem_bytes = (2 * tile_n * (c_in + out_cols) * itemsize
                  + 2 * tile_n * 4
                  + w_buf * w_bytes
                  + tile_n * (num_classes + out_channels) * 4)
    vmem_limit = int(min(56 << 20, max(32 << 20, vmem_bytes + (8 << 20))))

    if w_buf == 1:
        w_spec = pl.BlockSpec((num_classes, out_channels), lambda i: (0, 0),
                              pipeline_mode=pl.Buffered(1))
    else:
        w_spec = pl.BlockSpec((num_classes, out_channels), lambda i: (0, 0))

    kernel_fn = _mask_label_add_kernel if method == "add" else _mask_label_concat_kernel
    kernel = functools.partial(kernel_fn, num_classes=num_classes)

    out = pl.pallas_call(
        kernel,
        out_shape=jax.ShapeDtypeStruct((n_pad, out_cols), x.dtype),
        grid_spec=pltpu.PrefetchScalarGridSpec(
            num_scalar_prefetch=0,
            grid=(n_pad // tile_n,),
            in_specs=[
                pl.BlockSpec((tile_n, 1), lambda i: (i, 0)),       # y (mask folded in)
                pl.BlockSpec((tile_n, c_in), lambda i: (i, 0)),    # x
                w_spec,                                            # W (grid-invariant)
            ],
            out_specs=pl.BlockSpec((tile_n, out_cols), lambda i: (i, 0)),
        ),
        compiler_params=pltpu.CompilerParams(
            dimension_semantics=("parallel",),
            vmem_limit_bytes=vmem_limit,
        ),
    )(y_p, x_p, emb_weight)

    return out[:n] if n_pad != n else out


# ----------------------------------------------------------------------------
# Pure-JAX reference (mirrors the PyTorch semantics)
# ----------------------------------------------------------------------------
def mask_label_ref(x, y, mask, emb_weight, method="add"):
    emb = emb_weight[y]                                    # [N, out_channels]
    masked = jnp.where(mask[:, None], emb, 0.0)
    if method == "add":
        return x + masked
    return jnp.concatenate([x, masked], axis=-1)


# TODO(synk): MaskLabel.ratio_mask is a host-side RNG utility (not part of the
# forward pass) and is intentionally not implemented as a kernel.

# ----------------------------------------------------------------------------
# Main
# ----------------------------------------------------------------------------
if __name__ == "__main__":
    key = jax.random.PRNGKey(0)
    k_x, k_y, k_m, k_w = jax.random.split(key, 4)

    N = 60            # number of nodes (not a multiple of 8 -> exercises padding)
    C = 128           # in_channels == out_channels (lane-dense output)
    NUM_CLASSES = 16

    x = jax.random.normal(k_x, (N, C), dtype=jnp.float32)
    y = jax.random.randint(k_y, (N,), 0, NUM_CLASSES, dtype=jnp.int32)
    mask = jax.random.bernoulli(k_m, 0.5, (N,))
    # torch.nn.Embedding.reset_parameters() draws from N(0, 1):
    emb_weight = jax.random.normal(k_w, (NUM_CLASSES, C), dtype=jnp.float32)

    # method='add'
    out_add = mask_label(x, y, mask, emb_weight, method="add")
    jax.block_until_ready(out_add)
    ref_add = mask_label_ref(x, y, mask, emb_weight, method="add")
    assert out_add.shape == ref_add.shape
    assert jnp.allclose(out_add, ref_add, atol=1e-5, rtol=1e-5)

    # method='concat' (fused in-kernel; no wrapper-side concatenate)
    out_cat = mask_label(x, y, mask, emb_weight, method="concat")
    jax.block_until_ready(out_cat)
    ref_cat = mask_label_ref(x, y, mask, emb_weight, method="concat")
    assert out_cat.shape == ref_cat.shape
    assert jnp.allclose(out_cat, ref_cat, atol=1e-5, rtol=1e-5)

    print("KERNEL_OK")
</pallas_src>

<mosaic_0001>
module attributes {stable_mosaic.version = 11 : i64} {
  func.func @_mask_label_add_kernel(%arg0: i32, %arg1: memref<64x1xi32, #tpu.memory_space<vmem>>, %arg2: memref<64x128xf32, #tpu.memory_space<vmem>>, %arg3: memref<16x128xf32, #tpu.memory_space<vmem>>, %arg4: memref<64x128xf32, #tpu.memory_space<vmem>>) attributes {dimension_semantics = [#tpu.dimension_semantics<parallel>], iteration_bounds = array<i64: 1>, scalar_prefetch = 0 : i64, scratch_operands = 0 : i64, tpu.core_type = #tpu.core_type<tc>, window_params = [{transform_indices = @transform_0, window_bounds = array<i64: 64, 1>}, {transform_indices = @transform_1, window_bounds = array<i64: 64, 128>}, {pipeline_mode = #tpu.pipeline_mode<synchronous>, transform_indices = @transform_2, window_bounds = array<i64: 16, 128>}, {transform_indices = @transform_3, window_bounds = array<i64: 64, 128>}]} {
    %c0 = arith.constant 0 : index
    %c0_0 = arith.constant 0 : index
    %0 = vector.load %arg1[%c0, %c0_0] : memref<64x1xi32, #tpu.memory_space<vmem>>, vector<64x1xi32>
    %1 = tpu.iota {dimensions = array<i32: 1>} : vector<64x16xi32>
    %2 = vector.broadcast %0 : vector<64x1xi32> to vector<64x16xi32>
    %3 = arith.cmpi eq, %1, %2 : vector<64x16xi32>
    %4 = arith.extui %3 : vector<64x16xi1> to vector<64x16xi32>
    %5 = arith.sitofp %4 : vector<64x16xi32> to vector<64x16xf32>
    %c0_1 = arith.constant 0 : index
    %c0_2 = arith.constant 0 : index
    %6 = vector.load %arg3[%c0_1, %c0_2] : memref<16x128xf32, #tpu.memory_space<vmem>>, vector<16x128xf32>
    %cst = arith.constant dense<0.000000e+00> : vector<64x128xf32>
    %7 = tpu.matmul %5, %6, %cst {dimension_numbers = #tpu.dot_dimension_numbers<[1], [0], [0], [1], [0, 0, 1, 1], [], []>} : vector<64x16xf32>, vector<16x128xf32>, vector<64x128xf32> -> vector<64x128xf32>
    %c0_3 = arith.constant 0 : index
    %c0_4 = arith.constant 0 : index
    %8 = vector.load %arg2[%c0_3, %c0_4] : memref<64x128xf32, #tpu.memory_space<vmem>>, vector<64x128xf32>
    %9 = arith.addf %8, %7 : vector<64x128xf32>
    %c0_5 = arith.constant 0 : index
    %c0_6 = arith.constant 0 : index
    %10 = vector.load %arg4[%c0_5, %c0_6] : memref<64x128xf32, #tpu.memory_space<vmem>>, vector<64x128xf32>
    tpu.vector_store %arg4[%c0_5, %c0_6], %9 {strides = array<i32>} : memref<64x128xf32, #tpu.memory_space<vmem>>, vector<64x128xf32>,
    return
  }
  func.func @transform_0(%arg0: i32) -> (i32, i32) {
    %c0_i32 = arith.constant 0 : i32
    %c0_i32_0 = arith.constant 0 : i32
    return %arg0, %c0_i32 : i32, i32
  }
  func.func @transform_1(%arg0: i32) -> (i32, i32) {
    %c0_i32 = arith.constant 0 : i32
    %c0_i32_0 = arith.constant 0 : i32
    return %arg0, %c0_i32 : i32, i32
  }
  func.func @transform_2(%arg0: i32) -> (i32, i32) {
    %c0_i32 = arith.constant 0 : i32
    %c0_i32_0 = arith.constant 0 : i32
    %c0_i32_1 = arith.constant 0 : i32
    return %c0_i32, %c0_i32_0 : i32, i32
  }
  func.func @transform_3(%arg0: i32) -> (i32, i32) {
    %c0_i32 = arith.constant 0 : i32
    %c0_i32_0 = arith.constant 0 : i32
    return %arg0, %c0_i32 : i32, i32
  }
}

</mosaic_0001>

<llo_original>
// kernel: tpu_custom_call.1
$region0: #{tpu_custom_call.1}
  #allocation0 [shape = 'u32[]', space=smem, size = 0x4, offset = 0x4, fixed_abs, tag = 'smem constant byte address 0x4 - core index']
  #allocation1 [shape = 'u32[144,128]{1,0:T(1,128)}', space=vmem, size = 0x12000, scoped, tag = 'internal scratch']
  %s0 = inlined_call_operand.vmem [shape: s32[64,1], index: 0, kind: input, shape index: {}]
  %s1 = inlined_call_operand.vmem [shape: f32[64,128], index: 1, kind: input, shape index: {}]
  %s2 = inlined_call_operand.hbm [shape: f32[16,128], index: 2, kind: input, shape index: {}]
  %s3 = inlined_call_operand.hbm [shape: f32[64,128], index: 3, kind: output, shape index: {}]
  %s4 = sld [smem:[#allocation0]]
  $region26: #{tpu_custom_call.1} parent=0
    _
  %s6 = ssub.s32 1, %s4
  %s7 = scalar_select 0, %s6, %s4
  $region1: #{tpu_custom_call.1} parent=0
    #allocation2 [shape = 'u8[8192]{0}', space=vmem, size = 0x2000, scoped, tag = 'input window, operand 2, single buffered']
    #allocation3 [shape = 's32[1]{0}', space=sflag, size = 0x4, scoped, tag = 'scoped memory for tpu_custom_call.1']
    #allocation4 [shape = 's32[1]{0}', space=sflag, size = 0x4, scoped, tag = 'scoped memory for tpu_custom_call.1']
    #allocation5 [shape = 'u8[32768]{0}', space=vmem, size = 0x8000, scoped, tag = 'output window, operand 0, single buffered']
    %8 = vsyncpa [#allocation3], 0
    %9 = vsyncpa [#allocation4], 0
    // Predicated region
    $region2: #{tpu_custom_call.1} parent=1 // pred_check
      _
    $region3: #{tpu_custom_call.1} parent=1 // pred_check_branch
      %11 = sbr.rel (0) target = $region5
    $region4: #{tpu_custom_call.1} parent=1 // pred_region
      _
    $region5: #{tpu_custom_call.1} parent=1 // pred_fallthru
      _
    // Predicated region
    $region6: #{tpu_custom_call.1} parent=1 // pred_check
      _
    $region7: #{tpu_custom_call.1} parent=1 // pred_check_branch
      %13 = sbr.rel (0) target = $region9
    $region8: #{tpu_custom_call.1} parent=1 // pred_region
      _
    $region9: #{tpu_custom_call.1} parent=1 // pred_fallthru
      _
    // Predicated region
    $region10: #{tpu_custom_call.1} parent=1 // pred_check
      _
    $region11: #{tpu_custom_call.1} parent=1 // pred_check_branch
      %15 = sbr.rel (0) target = $region13
    $region12: #{tpu_custom_call.1} parent=1 // pred_region
      %s17 = ssub.s32 256, 256
      %18 = vsyncadd [#allocation3], %s17
      %s19 = sshll.u32 [#allocation2], 4
      %s20 = int_to_ptr.vmem [resolvable:$true] %s19
      %25 = dma.hbm_to_vmem [thread:$0]  %s2, 256, %s20, [#allocation3], 128, 128, 8
    $region13: #{tpu_custom_call.1} parent=1 // pred_fallthru
      _
    // Predicated region
    $region14: #{tpu_custom_call.1} parent=1 // pred_check
      _
    $region15: #{tpu_custom_call.1} parent=1 // pred_check_branch
      %27 = sbr.rel (0) target = $region17
    $region16: #{tpu_custom_call.1} parent=1 // pred_region
      %28 = dma.done [#allocation3], 256
    $region17: #{tpu_custom_call.1} parent=1 // pred_fallthru
      _
    %v29 = vld [vmem:[%s0] sm:$0xff]
    %v30 = vld [vmem:[%s0 + $0x8] sm:$0xff]
    %v31 = vld [vmem:[%s0 + $0x10] sm:$0xff]
    %v32 = vld [vmem:[%s0 + $0x18] sm:$0xff]
    %v33 = vld [vmem:[%s0 + $0x20] sm:$0xff]
    %v34 = vld [vmem:[%s0 + $0x28] sm:$0xff]
    %v35 = vld [vmem:[%s0 + $0x30] sm:$0xff]
    %v36 = vld [vmem:[%s0 + $0x38] sm:$0xff]
    %v37 = vlaneseq
    %v38 = vand.u32 %v37, 127
    %39 = vset.pattern.permute.xlu0 0
    %40 = vperm.xlu0 %39, %v29
    %v41 = vpop.permute.xlu0 %40
    %42 = vset.pattern.permute.xlu0 0
    %43 = vperm.xlu0 %42, %v30
    %v44 = vpop.permute.xlu0 %43
    %45 = vset.pattern.permute.xlu0 0
    %46 = vperm.xlu0 %45, %v31
    %v47 = vpop.permute.xlu0 %46
    %48 = vset.pattern.permute.xlu0 0
    %49 = vperm.xlu0 %48, %v32
    %v50 = vpop.permute.xlu0 %49
    %51 = vset.pattern.permute.xlu0 0
    %52 = vperm.xlu0 %51, %v33
    %v53 = vpop.permute.xlu0 %52
    %54 = vset.pattern.permute.xlu0 0
    %55 = vperm.xlu0 %54, %v34
    %v56 = vpop.permute.xlu0 %55
    %57 = vset.pattern.permute.xlu0 0
    %58 = vperm.xlu0 %57, %v35
    %v59 = vpop.permute.xlu0 %58
    %60 = vset.pattern.permute.xlu0 0
    %61 = vperm.xlu0 %60, %v36
    %v62 = vpop.permute.xlu0 %61
    %vm63 = vcmp.eq.s32.totalorder %v38, %v41
    %vm64 = vcmp.eq.s32.totalorder %v38, %v44
    %vm65 = vcmp.eq.s32.totalorder %v38, %v47
    %vm66 = vcmp.eq.s32.totalorder %v38, %v50
    %vm67 = vcmp.eq.s32.totalorder %v38, %v53
    %vm68 = vcmp.eq.s32.totalorder %v38, %v56
    %vm69 = vcmp.eq.s32.totalorder %v38, %v59
    %vm70 = vcmp.eq.s32.totalorder %v38, %v62
    %v71 = vsel %vm63, 1, 0
    %v72 = vsel %vm64, 1, 0
    %v73 = vsel %vm65, 1, 0
    %v74 = vsel %vm66, 1, 0
    %v75 = vsel %vm67, 1, 0
    %v76 = vsel %vm68, 1, 0
    %v77 = vsel %vm69, 1, 0
    %v78 = vsel %vm70, 1, 0
    %v79 = vcvt.s32.f32 %v71
    %v80 = vcvt.s32.f32 %v72
    %v81 = vcvt.s32.f32 %v73
    %v82 = vcvt.s32.f32 %v74
    %v83 = vcvt.s32.f32 %v75
    %v84 = vcvt.s32.f32 %v76
    %v85 = vcvt.s32.f32 %v77
    %v86 = vcvt.s32.f32 %v78
    %v87 = vld [vmem:[#allocation2] sm:$0xff]
    %v88 = vld [vmem:[#allocation2 + $0x8] sm:$0xff]
    %vm89 = vcmask 130048
    %v91 = vsel %vm89, %v79, 0
    %v94 = vsel %vm89, %v80, 0
    %v97 = vsel %vm89, %v81, 0
    %v100 = vsel %vm89, %v82, 0
    %v103 = vsel %vm89, %v83, 0
    %v106 = vsel %vm89, %v84, 0
    %v109 = vsel %vm89, %v85, 0
    %v112 = vsel %vm89, %v86, 0
    %114 = vmatprep.subr.mxu0 0.0
    %115 = vmatpush1.msra.mxu0 %v87
    %116 = vmatprep.subr.mxu0 0.0
    %117 = vmatpush1.msra.mxu0 %v88
    %118 = vmatprep.subr.mxu0 0.0
    %119 = vmatpush1.msra.mxu0 0.0
    %120 = vmatprep.subr.mxu0 0.0
    %121 = vmatpush1.msra.mxu0 0.0
    %122 = vmatprep.subr.mxu0 0.0
    %123 = vmatpush1.msra.mxu0 0.0
    %124 = vmatprep.subr.mxu0 0.0
    %125 = vmatpush1.msra.mxu0 0.0
    %126 = vmatprep.subr.mxu0 0.0
    %127 = vmatpush1.msra.mxu0 0.0
    %128 = vmatprep.subr.mxu0 0.0
    %129 = vmatpush1.msra.mxu0 0.0
    %130 = vmatprep.subr.mxu0 0.0
    %131 = vmatpush1.msra.mxu0 0.0
    %132 = vmatprep.subr.mxu0 0.0
    %133 = vmatpush1.msra.mxu0 0.0
    %134 = vmatprep.subr.mxu0 0.0
    %135 = vmatpush1.msra.mxu0 0.0
    %136 = vmatprep.subr.mxu0 0.0
    %137 = vmatpush1.msra.mxu0 0.0
    %138 = vmatprep.subr.mxu0 0.0
    %139 = vmatpush1.msra.mxu0 0.0
    %140 = vmatprep.subr.mxu0 0.0
    %141 = vmatpush1.msra.mxu0 0.0
    %142 = vmatprep.subr.mxu0 0.0
    %143 = vmatpush1.msra.mxu0 0.0
    %144 = vmatprep.subr.mxu0 0.0
    %145 = vmatpush1.msra.mxu0 0.0
    %146 = vmatprep.subr.mxu0 0.0
    %147 = vmatpush1.msra.mxu0 0.0
    %148 = vmatprep.subr.mxu0 0.0
    %149 = vmatpush1.msra.mxu0 0.0
    %150 = vmatprep.subr.mxu0 0.0
    %151 = vmatpush1.msra.mxu0 0.0
    %152 = vmatprep.subr.mxu0 0.0
    %153 = vmatpush1.msra.mxu0 0.0
    %154 = vmatprep.subr.mxu0 0.0
    %155 = vmatpush1.msra.mxu0 0.0
    %156 = vmatprep.subr.mxu0 0.0
    %157 = vmatpush1.msra.mxu0 0.0
    %158 = vmatprep.subr.mxu0 0.0
    %159 = vmatpush1.msra.mxu0 0.0
    %160 = vmatprep.subr.mxu0 0.0
    %161 = vmatpush1.msra.mxu0 0.0
    %162 = vmatprep.subr.mxu0 0.0
    %163 = vmatpush1.msra.mxu0 0.0
    %164 = vmatprep.subr.mxu0 0.0
    %165 = vmatpush1.msra.mxu0 0.0
    %166 = vmatprep.subr.mxu0 0.0
    %167 = vmatpush1.msra.mxu0 0.0
    %168 = vmatprep.subr.mxu0 0.0
    %169 = vmatpush1.msra.mxu0 0.0
    %170 = vmatprep.subr.mxu0 0.0
    %171 = vmatpush1.msra.mxu0 0.0
    %172 = vmatprep.subr.mxu0 0.0
    %173 = vmatpush1.msra.mxu0 0.0
    %174 = vmatprep.subr.mxu0 0.0
    %175 = vmatpush1.msra.mxu0 0.0
    %176 = vmatprep.subr.mxu0 0.0
    %177 = vmatpush1.msra.mxu0 0.0
    %178 = vmatprep.mubr.f32.mxu0 0.0
    %179 = vmatmul.mubr.f32.gmra.mrb[0].mxu0 %v91
    %v180 = vpop.f32.mrb[0].mxu0
    %v181 = vadd.f32 0.0, %v180
    %v182 = vpop.f32.mrb[0].mxu0
    %183 = vmatprep.mubr.f32.mxu0 0.0
    %184 = vmatmul.mubr.f32.gmra.mrb[0].mxu0 %v94
    %v185 = vpop.f32.mrb[0].mxu0
    %v186 = vadd.f32 0.0, %v185
    %v187 = vpop.f32.mrb[0].mxu0
    %188 = vmatprep.mubr.f32.mxu0 0.0
    %189 = vmatmul.mubr.f32.gmra.mrb[0].mxu0 %v97
    %v190 = vpop.f32.mrb[0].mxu0
    %v191 = vadd.f32 0.0, %v190
    %v192 = vpop.f32.mrb[0].mxu0
    %193 = vmatprep.mubr.f32.mxu0 0.0
    %194 = vmatmul.mubr.f32.gmra.mrb[0].mxu0 %v100
    %v195 = vpop.f32.mrb[0].mxu0
    %v196 = vadd.f32 0.0, %v195
    %v197 = vpop.f32.mrb[0].mxu0
    %198 = vmatprep.mubr.f32.mxu0 0.0
    %199 = vmatmul.mubr.f32.gmra.mrb[0].mxu0 %v103
    %v200 = vpop.f32.mrb[0].mxu0
    %v201 = vadd.f32 0.0, %v200
    %v202 = vpop.f32.mrb[0].mxu0
    %203 = vmatprep.mubr.f32.mxu0 0.0
    %204 = vmatmul.mubr.f32.gmra.mrb[0].mxu0 %v106
    %v205 = vpop.f32.mrb[0].mxu0
    %v206 = vadd.f32 0.0, %v205
    %v207 = vpop.f32.mrb[0].mxu0
    %208 = vmatprep.mubr.f32.mxu0 0.0
    %209 = vmatmul.mubr.f32.gmra.mrb[0].mxu0 %v109
    %v210 = vpop.f32.mrb[0].mxu0
    %v211 = vadd.f32 0.0, %v210
    %v212 = vpop.f32.mrb[0].mxu0
    %213 = vmatprep.mubr.f32.mxu0 0.0
    %214 = vmatmul.mubr.f32.gmra.mrb[0].mxu0 %v112
    %v215 = vpop.f32.mrb[0].mxu0
    %v216 = vadd.f32 0.0, %v215
    %v217 = vpop.f32.mrb[0].mxu0
    %218 = vdwg.mxu0
    %v219 = vld [vmem:[%s1] sm:$0xff]
    %v220 = vld [vmem:[%s1 + $0x8] sm:$0xff]
    %v221 = vld [vmem:[%s1 + $0x10] sm:$0xff]
    %v222 = vld [vmem:[%s1 + $0x18] sm:$0xff]
    %v223 = vld [vmem:[%s1 + $0x20] sm:$0xff]
    %v224 = vld [vmem:[%s1 + $0x28] sm:$0xff]
    %v225 = vld [vmem:[%s1 + $0x30] sm:$0xff]
    %v226 = vld [vmem:[%s1 + $0x38] sm:$0xff]
    %v227 = vadd.f32 %v219, %v181
    %v228 = vadd.f32 %v220, %v186
    %v229 = vadd.f32 %v221, %v191
    %v230 = vadd.f32 %v222, %v196
    %v231 = vadd.f32 %v223, %v201
    %v232 = vadd.f32 %v224, %v206
    %v233 = vadd.f32 %v225, %v211
    %v234 = vadd.f32 %v226, %v216
    %235 = vst [vmem:[#allocation5] sm:$0xff] %v227
    %236 = vst [vmem:[#allocation5 + $0x8] sm:$0xff] %v228
    %237 = vst [vmem:[#allocation5 + $0x10] sm:$0xff] %v229
    %238 = vst [vmem:[#allocation5 + $0x18] sm:$0xff] %v230
    %239 = vst [vmem:[#allocation5 + $0x20] sm:$0xff] %v231
    %240 = vst [vmem:[#allocation5 + $0x28] sm:$0xff] %v232
    %241 = vst [vmem:[#allocation5 + $0x30] sm:$0xff] %v233
    %242 = vst [vmem:[#allocation5 + $0x38] sm:$0xff] %v234
    // Predicated region
    $region18: #{tpu_custom_call.1} parent=1 // pred_check
      _
    $region19: #{tpu_custom_call.1} parent=1 // pred_check_branch
      %244 = sbr.rel (0) target = $region21
    $region20: #{tpu_custom_call.1} parent=1 // pred_region
      %s246 = ssub.s32 1024, 1024
      %247 = vsyncadd [#allocation4], %s246
      %s248 = sshll.u32 [#allocation5], 4
      %s249 = int_to_ptr.vmem [resolvable:$true] %s248
      %254 = dma.vmem_to_hbm [thread:$0]  %s249, 1024, %s3, [#allocation4], 128, 128, 8
    $region21: #{tpu_custom_call.1} parent=1 // pred_fallthru
      _
    // Predicated region
    $region22: #{tpu_custom_call.1} parent=1 // pred_check
      _
    $region23: #{tpu_custom_call.1} parent=1 // pred_check_branch
      %256 = sbr.rel (0) target = $region25
    $region24: #{tpu_custom_call.1} parent=1 // pred_region
      %257 = dma.done [#allocation4], 1024
    $region25: #{tpu_custom_call.1} parent=1 // pred_fallthru
      _
    %258 = vsyncpa [#allocation3], 1
    %259 = vsyncpa [#allocation4], 1

</llo_original>
